<compile_context>
chip_gen: v7x
topology: tpu7x:2x2x1
jax: 0.10.0
libtpu: 0.0.40
codegen_flags: <defaults>
</compile_context>

<pallas_src>
import functools

import jax
import jax.numpy as jnp
from jax import lax
from jax.experimental import pallas as pl
from jax.experimental.pallas import tpu as pltpu

EPS = 1e-5
_INV_SQRT2 = 0.7071067811865476

_LANE = 128        # vreg lane width -> lane-dense output stores
_ROW_ALIGN = 16    # sublane alignment valid for both f32 (8) and bf16 (16) packing
_TILE_VMEM_BUDGET = 8 * 1024 * 1024   # bytes for double-buffered in/out row tiles


def _round_up(a: int, b: int) -> int:
    return (a + b - 1) // b * b


def _make_kernel(c_out_true: int):
    inv_n = 1.0 / float(c_out_true)

    def kernel(x_ref, w_ref, b_ref, o_ref):
        # x_ref: (tm, C_in)   w_ref: (C_in, C_out_pad)   b_ref: (1, C_out_pad)
        x = x_ref[...]
        w = w_ref[...]
        b = b_ref[...]

        # Linear on the MXU, f32 accumulation.  Padded weight columns and bias
        # entries are zero, so padded lanes of y are exactly 0.
        y = jnp.dot(x, w, preferred_element_type=jnp.float32) + b

        # InstanceNorm1d over the true C_out lanes in a single reduction sweep:
        # zero-padded lanes contribute nothing to sum / sum of squares.
        s1 = jnp.sum(y, axis=-1, keepdims=True)
        s2 = jnp.sum(y * y, axis=-1, keepdims=True)
        mean = s1 * inv_n
        var = jnp.maximum(s2 * inv_n - mean * mean, 0.0)   # cancellation guard
        yn = (y - mean) * lax.rsqrt(var + EPS)

        # Exact erf GELU (matches nn.GELU() default semantics).  A tanh-approx
        # GELU would offload to the EUP slot but deviates from PyTorch numerics.
        out = 0.5 * yn * (1.0 + lax.erf(yn * _INV_SQRT2))
        o_ref[...] = out.astype(o_ref.dtype)

    return kernel


@functools.partial(jax.jit, static_argnames=("tm", "compute_dtype"))
def linear_batch_relu(x, weight, bias, *, tm=512, compute_dtype=jnp.bfloat16):
    """x: (B, L, C_in), weight: (C_out, C_in), bias: (C_out,) -> (B, L, C_out)."""
    B, L, c_in = x.shape
    c_out = weight.shape[0]
    rows = B * L
    out_dtype = x.dtype

    # ---- static tiling decisions (all shapes static under jit) ----
    c_out_pad = _round_up(c_out, _LANE)               # lane-dense output stores

    cd_size = jnp.dtype(compute_dtype).itemsize
    out_size = jnp.dtype(out_dtype).itemsize
    # per-row bytes: double-buffered x/out tiles + ~1 f32 intermediate copy.
    bytes_per_row = 2 * (c_in * cd_size + c_out_pad * out_size) + c_out_pad * 4
    max_tm = max(_ROW_ALIGN,
                 (_TILE_VMEM_BUDGET // bytes_per_row) // _ROW_ALIGN * _ROW_ALIGN)

    tm_eff = min(_round_up(tm, _ROW_ALIGN), _round_up(rows, _ROW_ALIGN), max_tm)
    rows_pad = _round_up(rows, tm_eff)
    grid = rows_pad // tm_eff

    # ---- wrapper-side layout plumbing ----
    x2d = x.reshape(rows, c_in).astype(compute_dtype)
    if rows_pad != rows:
        x2d = jnp.pad(x2d, ((0, rows_pad - rows), (0, 0)))

    w_t = weight.T.astype(compute_dtype)                        # (C_in, C_out)
    if c_out_pad != c_out:
        w_t = jnp.pad(w_t, ((0, 0), (0, c_out_pad - c_out)))    # zero columns
    b2d = bias.astype(jnp.float32).reshape(1, c_out)
    if c_out_pad != c_out:
        b2d = jnp.pad(b2d, ((0, 0), (0, c_out_pad - c_out)))

    out2d = pl.pallas_call(
        _make_kernel(c_out),
        out_shape=jax.ShapeDtypeStruct((rows_pad, c_out_pad), out_dtype),
        grid_spec=pltpu.PrefetchScalarGridSpec(
            num_scalar_prefetch=0,
            grid=(grid,),
            in_specs=[
                pl.BlockSpec((tm_eff, c_in), lambda i: (i, 0)),
                # Weight / bias block index never changes -> not re-DMA'd per step.
                pl.BlockSpec((c_in, c_out_pad), lambda i: (0, 0)),
                pl.BlockSpec((1, c_out_pad), lambda i: (0, 0)),
            ],
            out_specs=pl.BlockSpec((tm_eff, c_out_pad), lambda i: (i, 0)),
        ),
        compiler_params=pltpu.CompilerParams(
            dimension_semantics=("parallel",),
            vmem_limit_bytes=32 * 1024 * 1024,
        ),
    )(x2d, w_t, b2d)

    return out2d[:rows, :c_out].reshape(B, L, c_out)


def _reference(x, weight, bias):
    y = jnp.einsum("blc,oc->blo", x, weight) + bias
    mean = jnp.mean(y, axis=-1, keepdims=True)
    var = jnp.mean((y - mean) ** 2, axis=-1, keepdims=True)
    yn = (y - mean) / jnp.sqrt(var + EPS)
    return 0.5 * yn * (1.0 + lax.erf(yn * _INV_SQRT2))


if __name__ == "__main__":
    # Small shapes consistent with the module: batch=2, lookback_num=8,
    # in_ch=32, out_ch=64.
    B, L, in_ch, out_ch = 2, 8, 32, 64

    key = jax.random.PRNGKey(0)
    kx, kw, kb = jax.random.split(key, 3)

    x = jax.random.normal(kx, (B, L, in_ch), dtype=jnp.float32)
    # Deterministic PyTorch-like uniform init (bound 1/sqrt(in_ch)).
    bound = 1.0 / (in_ch ** 0.5)
    weight = jax.random.uniform(kw, (out_ch, in_ch), jnp.float32, -bound, bound)
    bias = jax.random.uniform(kb, (out_ch,), jnp.float32, -bound, bound)

    ref = _reference(x, weight, bias)

    # Exact f32 MXU path: matches the PyTorch f32 forward tightly.
    out_f32 = jax.block_until_ready(
        linear_batch_relu(x, weight, bias, compute_dtype=jnp.float32))
    assert out_f32.shape == (B, L, out_ch)
    assert jnp.allclose(out_f32, ref, atol=1e-4, rtol=1e-4), "f32 path mismatch"

    # Default bf16 DMA/MXU path (f32 accumulation, f32 norm + GELU stats).
    out_bf16 = jax.block_until_ready(linear_batch_relu(x, weight, bias))
    assert out_bf16.shape == (B, L, out_ch)
    assert jnp.allclose(out_bf16, ref, atol=3e-2, rtol=3e-2), "bf16 path mismatch"

    print("KERNEL_OK")
</pallas_src>

<mosaic_0001>
module attributes {stable_mosaic.version = 11 : i64} {
  func.func @kernel(%arg0: i32, %arg1: memref<16x32xf32, #tpu.memory_space<vmem>>, %arg2: memref<32x128xf32, #tpu.memory_space<vmem>>, %arg3: memref<1x128xf32, #tpu.memory_space<vmem>>, %arg4: memref<16x128xf32, #tpu.memory_space<vmem>>) attributes {dimension_semantics = [#tpu.dimension_semantics<parallel>], iteration_bounds = array<i64: 1>, scalar_prefetch = 0 : i64, scratch_operands = 0 : i64, tpu.core_type = #tpu.core_type<tc>, window_params = [{transform_indices = @transform_0, window_bounds = array<i64: 16, 32>}, {pipeline_mode = #tpu.pipeline_mode<synchronous>, transform_indices = @transform_1, window_bounds = array<i64: 32, 128>}, {pipeline_mode = #tpu.pipeline_mode<synchronous>, transform_indices = @transform_2, window_bounds = array<i64: 1, 128>}, {transform_indices = @transform_3, window_bounds = array<i64: 16, 128>}]} {
    %c0 = arith.constant 0 : index
    %c0_0 = arith.constant 0 : index
    %0 = vector.load %arg1[%c0, %c0_0] : memref<16x32xf32, #tpu.memory_space<vmem>>, vector<16x32xf32>
    %c0_1 = arith.constant 0 : index
    %c0_2 = arith.constant 0 : index
    %1 = vector.load %arg2[%c0_1, %c0_2] : memref<32x128xf32, #tpu.memory_space<vmem>>, vector<32x128xf32>
    %c0_3 = arith.constant 0 : index
    %c0_4 = arith.constant 0 : index
    %2 = vector.load %arg3[%c0_3, %c0_4] : memref<1x128xf32, #tpu.memory_space<vmem>>, vector<1x128xf32>
    %cst = arith.constant dense<0.000000e+00> : vector<16x128xf32>
    %3 = tpu.matmul %0, %1, %cst {dimension_numbers = #tpu.dot_dimension_numbers<[1], [0], [0], [1], [0, 0, 1, 1], [], []>} : vector<16x32xf32>, vector<32x128xf32>, vector<16x128xf32> -> vector<16x128xf32>
    %4 = vector.broadcast %2 : vector<1x128xf32> to vector<16x128xf32>
    %5 = arith.addf %3, %4 : vector<16x128xf32>
    %cst_5 = arith.constant dense<0.000000e+00> : vector<16xf32>
    %6 = vector.multi_reduction <add>, %5, %cst_5 [1] : vector<16x128xf32> to vector<16xf32>
    %7 = vector.shape_cast %6 : vector<16xf32> to vector<16x1xf32>
    %8 = arith.mulf %5, %5 : vector<16x128xf32>
    %cst_6 = arith.constant dense<0.000000e+00> : vector<16xf32>
    %9 = vector.multi_reduction <add>, %8, %cst_6 [1] : vector<16x128xf32> to vector<16xf32>
    %10 = vector.shape_cast %9 : vector<16xf32> to vector<16x1xf32>
    %cst_7 = arith.constant 1.562500e-02 : f32
    %11 = vector.broadcast %cst_7 : f32 to vector<16x1xf32>
    %12 = arith.mulf %7, %11 : vector<16x1xf32>
    %cst_8 = arith.constant 1.562500e-02 : f32
    %13 = vector.broadcast %cst_8 : f32 to vector<16x1xf32>
    %14 = arith.mulf %10, %13 : vector<16x1xf32>
    %15 = arith.mulf %12, %12 : vector<16x1xf32>
    %16 = arith.subf %14, %15 : vector<16x1xf32>
    %cst_9 = arith.constant 0.000000e+00 : f32
    %17 = vector.broadcast %cst_9 : f32 to vector<16x1xf32>
    %18 = arith.maximumf %16, %17 : vector<16x1xf32>
    %19 = vector.broadcast %12 : vector<16x1xf32> to vector<16x128xf32>
    %20 = arith.subf %5, %19 : vector<16x128xf32>
    %cst_10 = arith.constant 9.99999974E-6 : f32
    %21 = vector.broadcast %cst_10 : f32 to vector<16x1xf32>
    %22 = arith.addf %18, %21 : vector<16x1xf32>
    %23 = math.rsqrt %22 : vector<16x1xf32>
    %24 = vector.broadcast %23 : vector<16x1xf32> to vector<16x128xf32>
    %25 = arith.mulf %20, %24 : vector<16x128xf32>
    %cst_11 = arith.constant 5.000000e-01 : f32
    %26 = vector.broadcast %cst_11 : f32 to vector<16x128xf32>
    %27 = arith.mulf %26, %25 : vector<16x128xf32>
    %cst_12 = arith.constant 0.707106769 : f32
    %28 = vector.broadcast %cst_12 : f32 to vector<16x128xf32>
    %29 = arith.mulf %25, %28 : vector<16x128xf32>
    %30 = math.erf %29 : vector<16x128xf32>
    %cst_13 = arith.constant 1.000000e+00 : f32
    %31 = vector.broadcast %cst_13 : f32 to vector<16x128xf32>
    %32 = arith.addf %31, %30 : vector<16x128xf32>
    %33 = arith.mulf %27, %32 : vector<16x128xf32>
    %c0_14 = arith.constant 0 : index
    %c0_15 = arith.constant 0 : index
    %34 = vector.load %arg4[%c0_14, %c0_15] : memref<16x128xf32, #tpu.memory_space<vmem>>, vector<16x128xf32>
    tpu.vector_store %arg4[%c0_14, %c0_15], %33 {strides = array<i32>} : memref<16x128xf32, #tpu.memory_space<vmem>>, vector<16x128xf32>,
    return
  }
  func.func @transform_0(%arg0: i32) -> (i32, i32) {
    %c0_i32 = arith.constant 0 : i32
    %c0_i32_0 = arith.constant 0 : i32
    return %arg0, %c0_i32 : i32, i32
  }
  func.func @transform_1(%arg0: i32) -> (i32, i32) {
    %c0_i32 = arith.constant 0 : i32
    %c0_i32_0 = arith.constant 0 : i32
    %c0_i32_1 = arith.constant 0 : i32
    return %c0_i32, %c0_i32_0 : i32, i32
  }
  func.func @transform_2(%arg0: i32) -> (i32, i32) {
    %c0_i32 = arith.constant 0 : i32
    %c0_i32_0 = arith.constant 0 : i32
    %c0_i32_1 = arith.constant 0 : i32
    return %c0_i32, %c0_i32_0 : i32, i32
  }
  func.func @transform_3(%arg0: i32) -> (i32, i32) {
    %c0_i32 = arith.constant 0 : i32
    %c0_i32_0 = arith.constant 0 : i32
    return %arg0, %c0_i32 : i32, i32
  }
}

</mosaic_0001>

<llo_original>
// kernel: linear_batch_relu.1
$region0: #{linear_batch_relu.1}
  #allocation0 [shape = 'u32[]', space=smem, size = 0x4, offset = 0x4, fixed_abs, tag = 'smem constant byte address 0x4 - core index']
  #allocation1 [shape = 'u32[144,128]{1,0:T(1,128)}', space=vmem, size = 0x12000, scoped, tag = 'internal scratch']
  %s0 = inlined_call_operand.vmem [shape: f32[16,32], index: 0, kind: input, shape index: {}]
  %s1 = inlined_call_operand.vmem [shape: f32[32,128], index: 1, kind: input, shape index: {}]
  %s2 = inlined_call_operand.vmem [shape: f32[1,128], index: 2, kind: input, shape index: {}]
  %s3 = inlined_call_operand.vmem [shape: f32[16,128], index: 3, kind: output, shape index: {}]
  %s4 = sld [smem:[#allocation0]]
  $region22: #{linear_batch_relu.1} parent=0
    _
  %s6 = ssub.s32 1, %s4
  %s7 = scalar_select 0, %s6, %s4
  // Predicated region
  $region2: #{linear_batch_relu.1} parent=0 // pred_check
    _
  $region3: #{linear_batch_relu.1} parent=0 // pred_check_branch
    %9 = sbr.rel (0) target = $region5
  $region4: #{linear_batch_relu.1} parent=0 // pred_region
    _
  $region5: #{linear_batch_relu.1} parent=0 // pred_fallthru
    _
  // Predicated region
  $region6: #{linear_batch_relu.1} parent=0 // pred_check
    _
  $region7: #{linear_batch_relu.1} parent=0 // pred_check_branch
    %11 = sbr.rel (0) target = $region9
  $region8: #{linear_batch_relu.1} parent=0 // pred_region
    _
  $region9: #{linear_batch_relu.1} parent=0 // pred_fallthru
    _
  // Predicated region
  $region10: #{linear_batch_relu.1} parent=0 // pred_check
    _
  $region11: #{linear_batch_relu.1} parent=0 // pred_check_branch
    %13 = sbr.rel (0) target = $region13
  $region12: #{linear_batch_relu.1} parent=0 // pred_region
    _
  $region13: #{linear_batch_relu.1} parent=0 // pred_fallthru
    _
  %v14 = vld [vmem:[%s0] sm:$0xff]
  %v15 = vld [vmem:[%s0 + $0x8] sm:$0xff]
  %v16 = vld [vmem:[%s1] sm:$0xff]
  %v17 = vld [vmem:[%s1 + $0x8] sm:$0xff]
  %v18 = vld [vmem:[%s1 + $0x10] sm:$0xff]
  %v19 = vld [vmem:[%s1 + $0x18] sm:$0xff]
  %v20 = vld [vmem:[%s2] sm:$0x1]
  %v22 = vlaneseq
  %v23 = vshrl.u32 %v22, 7
  %v24 = vsub.s32 0, %v23
  %v25 = vrot.slane %v20, %v24
  %vm27 = vcmask 261120
  %v29 = vsel %vm27, %v14, 0
  %v32 = vsel %vm27, %v15, 0
  %34 = vmatprep.subr.mxu0 0.0
  %35 = vmatpush1.msra.mxu0 %v16
  %36 = vmatprep.subr.mxu0 0.0
  %37 = vmatpush1.msra.mxu0 %v17
  %38 = vmatprep.subr.mxu0 0.0
  %39 = vmatpush1.msra.mxu0 %v18
  %40 = vmatprep.subr.mxu0 0.0
  %41 = vmatpush1.msra.mxu0 %v19
  %42 = vmatprep.subr.mxu0 0.0
  %43 = vmatpush1.msra.mxu0 0.0
  %44 = vmatprep.subr.mxu0 0.0
  %45 = vmatpush1.msra.mxu0 0.0
  %46 = vmatprep.subr.mxu0 0.0
  %47 = vmatpush1.msra.mxu0 0.0
  %48 = vmatprep.subr.mxu0 0.0
  %49 = vmatpush1.msra.mxu0 0.0
  %50 = vmatprep.subr.mxu0 0.0
  %51 = vmatpush1.msra.mxu0 0.0
  %52 = vmatprep.subr.mxu0 0.0
  %53 = vmatpush1.msra.mxu0 0.0
  %54 = vmatprep.subr.mxu0 0.0
  %55 = vmatpush1.msra.mxu0 0.0
  %56 = vmatprep.subr.mxu0 0.0
  %57 = vmatpush1.msra.mxu0 0.0
  %58 = vmatprep.subr.mxu0 0.0
  %59 = vmatpush1.msra.mxu0 0.0
  %60 = vmatprep.subr.mxu0 0.0
  %61 = vmatpush1.msra.mxu0 0.0
  %62 = vmatprep.subr.mxu0 0.0
  %63 = vmatpush1.msra.mxu0 0.0
  %64 = vmatprep.subr.mxu0 0.0
  %65 = vmatpush1.msra.mxu0 0.0
  %66 = vmatprep.subr.mxu0 0.0
  %67 = vmatpush1.msra.mxu0 0.0
  %68 = vmatprep.subr.mxu0 0.0
  %69 = vmatpush1.msra.mxu0 0.0
  %70 = vmatprep.subr.mxu0 0.0
  %71 = vmatpush1.msra.mxu0 0.0
  %72 = vmatprep.subr.mxu0 0.0
  %73 = vmatpush1.msra.mxu0 0.0
  %74 = vmatprep.subr.mxu0 0.0
  %75 = vmatpush1.msra.mxu0 0.0
  %76 = vmatprep.subr.mxu0 0.0
  %77 = vmatpush1.msra.mxu0 0.0
  %78 = vmatprep.subr.mxu0 0.0
  %79 = vmatpush1.msra.mxu0 0.0
  %80 = vmatprep.subr.mxu0 0.0
  %81 = vmatpush1.msra.mxu0 0.0
  %82 = vmatprep.subr.mxu0 0.0
  %83 = vmatpush1.msra.mxu0 0.0
  %84 = vmatprep.subr.mxu0 0.0
  %85 = vmatpush1.msra.mxu0 0.0
  %86 = vmatprep.subr.mxu0 0.0
  %87 = vmatpush1.msra.mxu0 0.0
  %88 = vmatprep.subr.mxu0 0.0
  %89 = vmatpush1.msra.mxu0 0.0
  %90 = vmatprep.subr.mxu0 0.0
  %91 = vmatpush1.msra.mxu0 0.0
  %92 = vmatprep.subr.mxu0 0.0
  %93 = vmatpush1.msra.mxu0 0.0
  %94 = vmatprep.subr.mxu0 0.0
  %95 = vmatpush1.msra.mxu0 0.0
  %96 = vmatprep.subr.mxu0 0.0
  %97 = vmatpush1.msra.mxu0 0.0
  %98 = vmatprep.mubr.f32.mxu0 0.0
  %99 = vmatmul.mubr.f32.gmra.mrb[0].mxu0 %v29
  %v100 = vpop.f32.mrb[0].mxu0
  %v101 = vadd.f32 %v25, %v100
  %v102 = vpop.f32.mrb[0].mxu0
  %103 = vmatprep.mubr.f32.mxu0 0.0
  %104 = vmatmul.mubr.f32.gmra.mrb[0].mxu0 %v32
  %v105 = vpop.f32.mrb[0].mxu0
  %v106 = vadd.f32 %v25, %v105
  %v107 = vpop.f32.mrb[0].mxu0
  %108 = vdwg.mxu0
  %109 = vadd.xlane.f32.xlu0 %v101
  %v110 = vpop.xlane.xlu0 %109
  %111 = vadd.xlane.f32.xlu0 %v106
  %v112 = vpop.xlane.xlu0 %111
  %v113 = vmul.f32 %v101, %v101
  %v114 = vmul.f32 %v106, %v106
  %115 = vadd.xlane.f32.xlu0 %v113
  %v116 = vpop.xlane.xlu0 %115
  %117 = vadd.xlane.f32.xlu0 %v114
  %v118 = vpop.xlane.xlu0 %117
  %v119 = vmul.f32 %v110, 0.015625
  %v120 = vmul.f32 %v112, 0.015625
  %v121 = vmul.f32 %v116, 0.015625
  %v122 = vmul.f32 %v118, 0.015625
  %v123 = vmul.f32 %v119, %v119
  %v124 = vmul.f32 %v120, %v120
  %v125 = vsub.f32 %v121, %v123
  %v126 = vsub.f32 %v122, %v124
  %v127 = vmax.f32 %v125, 0.0
  %v128 = vmax.f32 %v126, 0.0
  %v129 = vsub.f32 %v101, %v119
  %v130 = vsub.f32 %v106, %v120
  %v131 = vadd.f32 %v127, 1e-05
  %v132 = vadd.f32 %v128, 1e-05
  %v133 = vrsqrt.pop %v131
  %v134 = vrsqrt.pop %v132
  %v135 = vmul.f32 %v129, %v133
  %v136 = vmul.f32 %v130, %v134
  %v137 = vmul.f32 %v135, 0.5
  %v138 = vmul.f32 %v136, 0.5
  %v139 = vmul.f32 %v135, 0.70710677
  %v140 = vmul.f32 %v136, 0.70710677
  %v141 = verf.f32.pop %v139
  %v142 = verf.f32.pop %v140
  %v143 = vadd.f32 %v141, 1.0
  %v144 = vadd.f32 %v142, 1.0
  %v145 = vmul.f32 %v137, %v143
  %v146 = vmul.f32 %v138, %v144
  %147 = vst [vmem:[%s3] sm:$0xff] %v145
  %148 = vst [vmem:[%s3 + $0x8] sm:$0xff] %v146
  // Predicated region
  $region14: #{linear_batch_relu.1} parent=0 // pred_check
    _
  $region15: #{linear_batch_relu.1} parent=0 // pred_check_branch
    %150 = sbr.rel (0) target = $region17
  $region16: #{linear_batch_relu.1} parent=0 // pred_region
    _
  $region17: #{linear_batch_relu.1} parent=0 // pred_fallthru
    _
  // Predicated region
  $region18: #{linear_batch_relu.1} parent=0 // pred_check
    _
  $region19: #{linear_batch_relu.1} parent=0 // pred_check_branch
    %152 = sbr.rel (0) target = $region21
  $region20: #{linear_batch_relu.1} parent=0 // pred_region
    _
  $region21: #{linear_batch_relu.1} parent=0 // pred_fallthru
    _

</llo_original>
